<compile_context>
chip_gen: v7x
topology: tpu7x:2x2x1
jax: 0.10.0
libtpu: 0.0.40
codegen_flags: <defaults>
</compile_context>

<pallas_src>
import functools

import jax
import jax.numpy as jnp
from jax.experimental import pallas as pl
from jax.experimental.pallas import tpu as pltpu

_LANES = 128
_MAX_TILE_ROWS = 1024  # (2 inputs + optional pos_weight) x 2 bufs x 1024x128 f32 <= 3 MiB


def _round_up(x, m):
    return (x + m - 1) // m * m


def _cel_sigmoid_kernel(*refs, pos_weight, n_valid, tile_rows, needs_mask,
                        has_pw_array):
    if has_pw_array:
        x_ref, t_ref, pw_ref, out_ref = refs
    else:
        x_ref, t_ref, out_ref = refs
        pw_ref = None

    x = x_ref[...].astype(jnp.float32)
    t = t_ref[...].astype(jnp.float32)

    # Numerically stable softplus(-x) = log1p(exp(-|x|)) + max(-x, 0)  (EUP ops).
    sp = jnp.log1p(jnp.exp(-jnp.abs(x))) + jnp.maximum(-x, 0.0)

    if has_pw_array:
        pw = pw_ref[...].astype(jnp.float32)
        log_weight = 1.0 + (pw - 1.0) * t
        loss = (1.0 - t) * x + log_weight * sp
    elif pos_weight == 1.0:
        # Trace-time specialization: log_weight == 1 -> drop the extra mul/add.
        loss = x - x * t + sp
    else:
        log_weight = 1.0 + (pos_weight - 1.0) * t
        loss = (1.0 - t) * x + log_weight * sp

    if needs_mask:
        # Zero padded tail elements exactly (BCE at x=0,t=0 is log 2, not 0).
        row = jax.lax.broadcasted_iota(jnp.int32, loss.shape, 0)
        lane = jax.lax.broadcasted_iota(jnp.int32, loss.shape, 1)
        gidx = (pl.program_id(0) * tile_rows + row) * _LANES + lane
        loss = jnp.where(gidx < n_valid, loss, 0.0)

    # Blocked, VPU-only reduction: collapse groups of 8 rows into one (8, 128)
    # vreg of partial sums. The cross-lane reduce happens once in the wrapper.
    partial = jnp.sum(loss.reshape(tile_rows // 8, 8, _LANES), axis=0)
    out_ref[...] = partial


def cel_sigmoid(logits, targets, *, ratio=0.5, pos_weight=1.0, size_average=True):
    """Pallas implementation of CEL_Sigmoid.forward (sample_weight=None path).

    `pos_weight` may be a Python scalar (folded at trace time) or a
    per-attribute vector of shape (num_attrs,) (broadcast over the batch),
    matching torch's BCEWithLogitsLoss pos_weight semantics.
    """
    # TODO(synk): the `mask`/`ratio` and sample_weight (ratio2weight) branch of
    # the torch module is dead code when sample_weight is None (it only prints),
    # so it is intentionally not lowered.
    assert logits.shape == targets.shape
    batch_size = logits.shape[0]
    total = int(logits.size)

    # ---- lane-dense layout: flatten + pad + view as (rows, 128) ----
    rows = -(-total // _LANES)
    tile_rows = min(_MAX_TILE_ROWS, _round_up(max(rows, 1), 8))
    num_tiles = -(-rows // tile_rows)
    padded_rows = num_tiles * tile_rows
    padded_total = padded_rows * _LANES
    needs_mask = padded_total != total

    def _prep(a):
        flat = a.reshape(-1)
        if needs_mask:
            flat = jnp.pad(flat, (0, padded_total - total))
        return flat.reshape(padded_rows, _LANES)

    operands = [_prep(logits), _prep(targets)]

    if isinstance(pos_weight, (int, float)):
        pw_scalar = float(pos_weight)
        has_pw_array = False
    else:
        pw_scalar = 1.0  # unused on this path
        has_pw_array = True
        pw_full = jnp.broadcast_to(
            jnp.asarray(pos_weight, jnp.float32), logits.shape)
        operands.append(_prep(pw_full))

    kernel = functools.partial(
        _cel_sigmoid_kernel,
        pos_weight=pw_scalar,
        n_valid=total,
        tile_rows=tile_rows,
        needs_mask=needs_mask,
        has_pw_array=has_pw_array,
    )

    in_specs = [pl.BlockSpec((tile_rows, _LANES), lambda i: (i, 0))
                for _ in operands]
    # One independent (8, 128) partial-sum block per grid step: lane/sublane
    # dense stores and a "parallel" grid axis (v7x megacore shards the tiles).
    out_spec = pl.BlockSpec((8, _LANES), lambda i: (0, i))

    partials = pl.pallas_call(
        kernel,
        out_shape=jax.ShapeDtypeStruct((8, num_tiles * _LANES), jnp.float32),
        grid_spec=pltpu.PrefetchScalarGridSpec(
            num_scalar_prefetch=0,
            grid=(num_tiles,),
            in_specs=in_specs,
            out_specs=out_spec,
        ),
        compiler_params=pltpu.CompilerParams(
            dimension_semantics=("parallel",),
        ),
    )(*operands)

    # Tiny final cross-lane reduction + size_average in plain XLA.
    loss_sum = jnp.sum(partials, dtype=jnp.float32)
    return loss_sum / batch_size if size_average else loss_sum


def _reference(logits, targets, *, pos_weight=1.0, size_average=True):
    x = logits.astype(jnp.float32)
    t = targets.astype(jnp.float32)
    pw = jnp.asarray(pos_weight, jnp.float32)
    log_weight = 1.0 + (pw - 1.0) * t
    loss = (1.0 - t) * x + log_weight * (
        jnp.log1p(jnp.exp(-jnp.abs(x))) + jnp.maximum(-x, 0.0)
    )
    s = jnp.sum(loss)
    return s / logits.shape[0] if size_average else s


if __name__ == "__main__":
    key = jax.random.PRNGKey(0)
    k1, k2, k3, k4 = jax.random.split(key, 4)

    # Case 1: tiny pedestrian-attribute shape, f32, default scalar pos_weight=1.
    batch, num_attrs = 8, 32
    logits = jax.random.normal(k1, (batch, num_attrs), dtype=jnp.float32)
    targets = (jax.random.uniform(k2, (batch, num_attrs)) > 0.5).astype(jnp.float32)
    out1 = jax.block_until_ready(cel_sigmoid(logits, targets))
    ref1 = _reference(logits, targets)
    assert jnp.allclose(out1, ref1, rtol=1e-5, atol=1e-5), (out1, ref1)

    # Case 2: scalar pos_weight != 1 (non-specialized constant path).
    out2 = jax.block_until_ready(cel_sigmoid(logits, targets, pos_weight=2.0))
    ref2 = _reference(logits, targets, pos_weight=2.0)
    assert jnp.allclose(out2, ref2, rtol=1e-5, atol=1e-5), (out2, ref2)

    # Case 3: PETA-style 51 attributes, per-attribute pos_weight vector, sum (no avg).
    b3, a3 = 16, 51
    lg3 = jax.random.normal(k3, (b3, a3), dtype=jnp.float32)
    tg3 = (jax.random.uniform(k4, (b3, a3)) > 0.5).astype(jnp.float32)
    pw3 = jnp.linspace(0.5, 2.0, a3, dtype=jnp.float32)
    out3 = jax.block_until_ready(
        cel_sigmoid(lg3, tg3, pos_weight=pw3, size_average=False))
    ref3 = _reference(lg3, tg3, pos_weight=pw3, size_average=False)
    assert jnp.allclose(out3, ref3, rtol=1e-5, atol=1e-5), (out3, ref3)

    # Case 4: bf16 inputs at the boundary (halves HBM traffic; math stays f32).
    out4 = jax.block_until_ready(
        cel_sigmoid(logits.astype(jnp.bfloat16), targets.astype(jnp.bfloat16)))
    ref4 = _reference(logits.astype(jnp.bfloat16), targets.astype(jnp.bfloat16))
    assert jnp.allclose(out4, ref4, rtol=2e-3, atol=2e-3), (out4, ref4)

    print("KERNEL_OK")
</pallas_src>

<mosaic_0001>
module attributes {stable_mosaic.version = 11 : i64} {
  func.func @_cel_sigmoid_kernel(%arg0: i32, %arg1: memref<8x128xf32, #tpu.memory_space<vmem>>, %arg2: memref<8x128xf32, #tpu.memory_space<vmem>>, %arg3: memref<8x128xf32, #tpu.memory_space<vmem>>) attributes {dimension_semantics = [#tpu.dimension_semantics<parallel>], iteration_bounds = array<i64: 1>, scalar_prefetch = 0 : i64, scratch_operands = 0 : i64, tpu.core_type = #tpu.core_type<tc>, window_params = [{transform_indices = @transform_0, window_bounds = array<i64: 8, 128>}, {transform_indices = @transform_1, window_bounds = array<i64: 8, 128>}, {transform_indices = @transform_2, window_bounds = array<i64: 8, 128>}]} {
    %c0 = arith.constant 0 : index
    %c0_0 = arith.constant 0 : index
    %0 = vector.load %arg1[%c0, %c0_0] : memref<8x128xf32, #tpu.memory_space<vmem>>, vector<8x128xf32>
    %c0_1 = arith.constant 0 : index
    %c0_2 = arith.constant 0 : index
    %1 = vector.load %arg2[%c0_1, %c0_2] : memref<8x128xf32, #tpu.memory_space<vmem>>, vector<8x128xf32>
    %2 = math.absf %0 : vector<8x128xf32>
    %cst = arith.constant 0.000000e+00 : f32
    %3 = vector.broadcast %cst : f32 to vector<8x128xf32>
    %4 = arith.subf %3, %2 : vector<8x128xf32>
    %5 = math.exp %4 : vector<8x128xf32>
    %6 = math.log1p %5 : vector<8x128xf32>
    %cst_3 = arith.constant 0.000000e+00 : f32
    %7 = vector.broadcast %cst_3 : f32 to vector<8x128xf32>
    %8 = arith.subf %7, %0 : vector<8x128xf32>
    %cst_4 = arith.constant 0.000000e+00 : f32
    %9 = vector.broadcast %cst_4 : f32 to vector<8x128xf32>
    %10 = arith.maximumf %8, %9 : vector<8x128xf32>
    %11 = arith.addf %6, %10 : vector<8x128xf32>
    %12 = arith.mulf %0, %1 : vector<8x128xf32>
    %13 = arith.subf %0, %12 : vector<8x128xf32>
    %14 = arith.addf %13, %11 : vector<8x128xf32>
    %15 = tpu.iota {dimensions = array<i32: 0>} : vector<8x128xi32>
    %16 = tpu.iota {dimensions = array<i32: 1>} : vector<8x128xi32>
    %c8_i32 = arith.constant 8 : i32
    %17 = arith.muli %arg0, %c8_i32 : i32
    %18 = vector.broadcast %17 : i32 to vector<8x128xi32>
    %19 = arith.addi %18, %15 : vector<8x128xi32>
    %c128_i32 = arith.constant 128 : i32
    %20 = vector.broadcast %c128_i32 : i32 to vector<8x128xi32>
    %21 = arith.muli %19, %20 : vector<8x128xi32>
    %22 = arith.addi %21, %16 : vector<8x128xi32>
    %c256_i32 = arith.constant 256 : i32
    %23 = vector.broadcast %c256_i32 : i32 to vector<8x128xi32>
    %24 = arith.cmpi slt, %22, %23 : vector<8x128xi32>
    %cst_5 = arith.constant 0.000000e+00 : f32
    %25 = vector.broadcast %cst_5 : f32 to vector<8x128xf32>
    %26 = arith.select %24, %14, %25 : vector<8x128xi1>, vector<8x128xf32>
    %27 = vector.shape_cast %26 : vector<8x128xf32> to vector<1x8x128xf32>
    %cst_6 = arith.constant dense<0.000000e+00> : vector<8x128xf32>
    %28 = vector.multi_reduction <add>, %27, %cst_6 [0] : vector<1x8x128xf32> to vector<8x128xf32>
    %c0_7 = arith.constant 0 : index
    %c0_8 = arith.constant 0 : index
    %29 = vector.load %arg3[%c0_7, %c0_8] : memref<8x128xf32, #tpu.memory_space<vmem>>, vector<8x128xf32>
    tpu.vector_store %arg3[%c0_7, %c0_8], %28 {strides = array<i32>} : memref<8x128xf32, #tpu.memory_space<vmem>>, vector<8x128xf32>,
    return
  }
  func.func @transform_0(%arg0: i32) -> (i32, i32) {
    %c0_i32 = arith.constant 0 : i32
    %c0_i32_0 = arith.constant 0 : i32
    return %arg0, %c0_i32 : i32, i32
  }
  func.func @transform_1(%arg0: i32) -> (i32, i32) {
    %c0_i32 = arith.constant 0 : i32
    %c0_i32_0 = arith.constant 0 : i32
    return %arg0, %c0_i32 : i32, i32
  }
  func.func @transform_2(%arg0: i32) -> (i32, i32) {
    %c0_i32 = arith.constant 0 : i32
    %c0_i32_0 = arith.constant 0 : i32
    return %c0_i32, %arg0 : i32, i32
  }
}

</mosaic_0001>

<llo_original>
// kernel: tpu_custom_call.1
$region0: #{tpu_custom_call.1}
  #allocation0 [shape = 'u32[]', space=smem, size = 0x4, offset = 0x4, fixed_abs, tag = 'smem constant byte address 0x4 - core index']
  #allocation1 [shape = 'u32[144,128]{1,0:T(1,128)}', space=vmem, size = 0x12000, scoped, tag = 'internal scratch']
  %s0 = inlined_call_operand.hbm [shape: f32[8,128], index: 0, kind: input, shape index: {}]
  %s1 = inlined_call_operand.hbm [shape: f32[8,128], index: 1, kind: input, shape index: {}]
  %s2 = inlined_call_operand.hbm [shape: f32[8,128], index: 2, kind: output, shape index: {}]
  %s3 = sld [smem:[#allocation0]]
  $region26: #{tpu_custom_call.1} parent=0
    _
  %s5 = ssub.s32 1, %s3
  %s6 = scalar_select 0, %s5, %s3
  $region1: #{tpu_custom_call.1} parent=0
    #allocation2 [shape = 'u8[4096]{0}', space=vmem, size = 0x1000, scoped, tag = 'input window, operand 0, single buffered']
    #allocation3 [shape = 's32[1]{0}', space=sflag, size = 0x4, scoped, tag = 'scoped memory for tpu_custom_call.1']
    #allocation4 [shape = 's32[1]{0}', space=sflag, size = 0x4, scoped, tag = 'scoped memory for tpu_custom_call.1']
    #allocation5 [shape = 'u8[4096]{0}', space=vmem, size = 0x1000, scoped, tag = 'input window, operand 1, single buffered']
    #allocation6 [shape = 's32[1]{0}', space=sflag, size = 0x4, scoped, tag = 'scoped memory for tpu_custom_call.1']
    #allocation7 [shape = 'u8[4096]{0}', space=vmem, size = 0x1000, scoped, tag = 'output window, operand 0, single buffered']
    %7 = vsyncpa [#allocation3], 0
    %8 = vsyncpa [#allocation6], 0
    %9 = vsyncpa [#allocation4], 0
    // Predicated region
    $region2: #{tpu_custom_call.1} parent=1 // pred_check
      _
    $region3: #{tpu_custom_call.1} parent=1 // pred_check_branch
      %11 = sbr.rel (0) target = $region5
    $region4: #{tpu_custom_call.1} parent=1 // pred_region
      %s13 = ssub.s32 128, 128
      %14 = vsyncadd [#allocation3], %s13
      %s16 = sshll.u32 [#allocation2], 4
      %s17 = int_to_ptr.vmem [resolvable:$true] %s16
      %19 = dma.hbm_to_vmem [thread:$0]  %s0, 128, %s17, [#allocation3]
    $region5: #{tpu_custom_call.1} parent=1 // pred_fallthru
      _
    // Predicated region
    $region6: #{tpu_custom_call.1} parent=1 // pred_check
      _
    $region7: #{tpu_custom_call.1} parent=1 // pred_check_branch
      %21 = sbr.rel (0) target = $region9
    $region8: #{tpu_custom_call.1} parent=1 // pred_region
      %s23 = ssub.s32 128, 128
      %24 = vsyncadd [#allocation6], %s23
      %s26 = sshll.u32 [#allocation5], 4
      %s27 = int_to_ptr.vmem [resolvable:$true] %s26
      %29 = dma.hbm_to_vmem [thread:$0]  %s1, 128, %s27, [#allocation6]
    $region9: #{tpu_custom_call.1} parent=1 // pred_fallthru
      _
    // Predicated region
    $region10: #{tpu_custom_call.1} parent=1 // pred_check
      _
    $region11: #{tpu_custom_call.1} parent=1 // pred_check_branch
      %31 = sbr.rel (0) target = $region13
    $region12: #{tpu_custom_call.1} parent=1 // pred_region
      %32 = dma.done [#allocation3], 128
    $region13: #{tpu_custom_call.1} parent=1 // pred_fallthru
      _
    // Predicated region
    $region14: #{tpu_custom_call.1} parent=1 // pred_check
      _
    $region15: #{tpu_custom_call.1} parent=1 // pred_check_branch
      %34 = sbr.rel (0) target = $region17
    $region16: #{tpu_custom_call.1} parent=1 // pred_region
      %35 = dma.done [#allocation6], 128
    $region17: #{tpu_custom_call.1} parent=1 // pred_fallthru
      _
    %v36 = vld [vmem:[#allocation2] sm:$0xff]
    %v37 = vld [vmem:[#allocation5] sm:$0xff]
    %v38 = vand.u32 2147483647, %v36
    %v39 = vsub.f32 0.0, %v38
    %v40 = vmul.f32 %v39, 1.442695
    %v41 = vpow.pop %v40
    %v42 = vadd.f32 %v41, 1.0
    %v43 = vlog2.pop %v42
    %v44 = vmul.f32 %v43, 0.6931472
    %v45 = vmul.f32 -0.5, %v41
    %v46 = vadd.f32 %v45, 1.0
    %v47 = vmul.f32 %v46, %v41
    %v48 = vand.u32 2147483647, %v41
    %vm49 = vcmp.lt.f32.partialorder %v48, 0.0004427343
    %v50 = vsel %vm49, %v47, %v44
    %v51 = vsub.f32 0.0, %v36
    %v52 = vmax.f32 %v51, 0.0
    %v53 = vadd.f32 %v50, %v52
    %v54 = vmul.f32 %v36, %v37
    %v55 = vsub.f32 %v36, %v54
    %v56 = vadd.f32 %v55, %v53
    %v57 = vlaneseq
    %v58 = vshrl.u32 %v57, 7
    %v59 = vlaneseq
    %v60 = vand.u32 %v59, 127
    %s61 = smul.u32 0, 8
    %v62 = vstv %s61
    %v63 = vadd.s32 %v62, %v58
    %v64 = vmul.u32 %v63, 128
    %v65 = vadd.s32 %v64, %v60
    %vm66 = vcmp.lt.s32.totalorder %v65, 256
    %v67 = vsel %vm66, %v56, 0.0
    %v68 = vadd.f32 %v67, 0.0
    %69 = vst [vmem:[#allocation7] sm:$0xff] %v68
    // Predicated region
    $region18: #{tpu_custom_call.1} parent=1 // pred_check
      _
    $region19: #{tpu_custom_call.1} parent=1 // pred_check_branch
      %71 = sbr.rel (0) target = $region21
    $region20: #{tpu_custom_call.1} parent=1 // pred_region
      %s73 = ssub.s32 128, 128
      %74 = vsyncadd [#allocation4], %s73
      %s76 = sshll.u32 [#allocation7], 4
      %s77 = int_to_ptr.vmem [resolvable:$true] %s76
      %79 = dma.vmem_to_hbm [thread:$0]  %s77, 128, %s2, [#allocation4]
    $region21: #{tpu_custom_call.1} parent=1 // pred_fallthru
      _
    // Predicated region
    $region22: #{tpu_custom_call.1} parent=1 // pred_check
      _
    $region23: #{tpu_custom_call.1} parent=1 // pred_check_branch
      %81 = sbr.rel (0) target = $region25
    $region24: #{tpu_custom_call.1} parent=1 // pred_region
      %82 = dma.done [#allocation4], 128
    $region25: #{tpu_custom_call.1} parent=1 // pred_fallthru
      _
    %83 = vsyncpa [#allocation3], 1
    %84 = vsyncpa [#allocation6], 1
    %85 = vsyncpa [#allocation4], 1

</llo_original>
